<compile_context>
chip_gen: v7x
topology: tpu7x:2x2x1
jax: 0.10.0
libtpu: 0.0.40
codegen_flags: <defaults>
</compile_context>

<pallas_src>
import functools

import jax
import jax.numpy as jnp
from jax import lax
from jax.experimental import pallas as pl
from jax.experimental.pallas import tpu as pltpu

DTYPE = jnp.bfloat16


# ----------------------- grouped expert-MLP Pallas kernel -------------------

def _expert_gmm_kernel(gids_ref, x_ref, w_ref, up_ref, down_ref, o_ref):
    """One token tile for one expert.

    gids_ref : (n_tiles,) int32 SMEM - expert id per tile (used in index_maps)
    x_ref    : (tm, D)  bf16  - sorted/padded token tile
    w_ref    : (tm, 1)  f32   - per-row combine weight (0 for padding rows)
    up_ref   : (1, D, H) bf16 - up_proj of this tile's expert   (streamed)
    down_ref : (1, H, D) bf16 - down_proj of this tile's expert (streamed)
    o_ref    : (tm, D)  bf16  - weighted expert output for this tile
    """
    del gids_ref  # only consumed by the BlockSpec index_maps
    x = x_ref[...]
    h = jnp.dot(x, up_ref[0], preferred_element_type=jnp.float32)       # (tm, H)
    h = h * jax.nn.sigmoid(h)                                           # SiLU, f32
    y = jnp.dot(h.astype(x.dtype), down_ref[0],
                preferred_element_type=jnp.float32)                     # (tm, D)
    o_ref[...] = (w_ref[...] * y).astype(o_ref.dtype)


# ------------------------------ JAX wrapper ---------------------------------

def sparse_moe_forward(x, gate_w, up_w, down_w, *, top_k, token_tile=256):
    """x: (B, S, D) bf16; gate_w: (E, D); up_w: (E, H, D); down_w: (E, D, H)
    (native nn.Linear layouts).

    token_tile: rows per grouped-GEMM grid step (multiple of 8).  Weight DMA is
    amortized over the whole expert group (consecutive same-expert tiles reuse
    the resident block), so 256 works on v5e/v6e/v7x; raise towards 512 on v6e
    (128 MiB VMEM) if the bundle shows exposed DMA, keep <=384 on v7x (64 MiB).
    """
    B, S, D = x.shape
    E, H, _ = up_w.shape
    T = B * S
    A = T * top_k                                   # number of (token, expert) pairs
    x2d = x.reshape(T, D)

    tm = max(8, (int(token_tile) // 8) * 8)

    # ---------------- router (tiny: T x D x E) + top-k, in XLA --------------
    logits = jnp.dot(x2d, gate_w.T, preferred_element_type=jnp.float32)
    logits = logits.astype(jnp.bfloat16).astype(jnp.float32)    # bf16 Linear output
    scores, idx = lax.top_k(logits, top_k)                      # (T, k)
    gate_p = jax.nn.softmax(scores, axis=-1)                    # (T, k), f32

    # -------- grouped schedule: sort assignments by expert, pad per group ----
    flat_e = idx.reshape(A).astype(jnp.int32)
    flat_w = gate_p.reshape(A)
    flat_tok = (jnp.arange(A, dtype=jnp.int32) // top_k).astype(jnp.int32)

    order = jnp.argsort(flat_e)                     # group assignments by expert
    sorted_e = flat_e[order]
    sorted_w = flat_w[order]
    sorted_tok = flat_tok[order]

    n_tiles = int(pl.cdiv(A, tm)) + E               # static bound incl. group padding
    s_buf = n_tiles * tm

    cnt = jnp.bincount(flat_e, length=E).astype(jnp.int32)            # (E,)
    padded_cnt = ((cnt + tm - 1) // tm) * tm                          # group -> tile multiple
    zero = jnp.zeros((1,), jnp.int32)
    pstart = jnp.concatenate([zero, jnp.cumsum(padded_cnt)]).astype(jnp.int32)  # (E+1,)
    ustart = jnp.concatenate([zero, jnp.cumsum(cnt)]).astype(jnp.int32)
    # buffer row of each sorted assignment (every expert group starts on a tile)
    pos = pstart[sorted_e] + (jnp.arange(A, dtype=jnp.int32) - ustart[sorted_e])

    buf_tok = jnp.zeros((s_buf,), jnp.int32).at[pos].set(sorted_tok)
    buf_w = jnp.zeros((s_buf,), jnp.float32).at[pos].set(sorted_w)    # 0 on pad rows
    x_buf = jnp.take(x2d, buf_tok, axis=0)          # (s_buf, D); pad rows read x[0]

    # expert id of every tile (tiles never straddle groups; unused tail tiles
    # clamp to the last expert so they do not trigger an extra weight DMA)
    tile_starts = jnp.arange(n_tiles, dtype=jnp.int32) * tm
    gids = jnp.clip(jnp.searchsorted(pstart, tile_starts, side="right") - 1,
                    0, E - 1).astype(jnp.int32)

    # MXU-standard (K, N) weight layouts, transposed once per call.
    up_t = jnp.swapaxes(up_w, 1, 2)      # (E, D, H)
    down_t = jnp.swapaxes(down_w, 1, 2)  # (E, H, D)

    # Per-step VMEM footprint (double-buffered) -> explicit scoped-VMEM limit.
    need = (2 * tm * D * 2               # x tile (bf16)
            + 2 * tm * 128 * 4           # combine-weight tile (f32, lane-padded)
            + 2 * (D * H * 2 + H * D * 2)  # up + down weight blocks (bf16)
            + 2 * tm * D * 2)            # output tile (bf16)
    vmem_limit = int(min(max(2 * need, 16 * 1024 * 1024), 100 * 1024 * 1024))

    y_buf = pl.pallas_call(
        _expert_gmm_kernel,
        out_shape=jax.ShapeDtypeStruct((s_buf, D), x.dtype),
        grid_spec=pltpu.PrefetchScalarGridSpec(
            num_scalar_prefetch=1,
            grid=(n_tiles,),
            in_specs=[
                pl.BlockSpec((tm, D), lambda t, g: (t, 0)),           # tokens
                pl.BlockSpec((tm, 1), lambda t, g: (t, 0)),           # combine w
                pl.BlockSpec((1, D, H), lambda t, g: (g[t], 0, 0)),   # up[e]
                pl.BlockSpec((1, H, D), lambda t, g: (g[t], 0, 0)),   # down[e]
            ],
            out_specs=pl.BlockSpec((tm, D), lambda t, g: (t, 0)),
        ),
        compiler_params=pltpu.CompilerParams(
            dimension_semantics=("parallel",),
            vmem_limit_bytes=vmem_limit),
    )(gids, x_buf, buf_w[:, None], up_t, down_t)

    # --------- un-permute: gather each token's k weighted outputs, sum -------
    flat_pos = jnp.zeros((A,), jnp.int32).at[order].set(pos)
    out = jnp.take(y_buf.astype(jnp.float32), flat_pos, axis=0)
    out = out.reshape(T, top_k, D).sum(axis=1)
    return out.astype(x.dtype).reshape(B, S, D)


# --------------------------- pure-JAX reference -----------------------------

def sparse_moe_reference(x, gate_w, up_w, down_w, top_k):
    B, S, D = x.shape
    T = B * S
    x2d = x.reshape(T, D)
    logits = jnp.dot(x2d, gate_w.T, preferred_element_type=jnp.float32)
    logits = logits.astype(jnp.bfloat16).astype(jnp.float32)
    scores, idx = lax.top_k(logits, top_k)
    gw = jax.nn.softmax(scores, axis=-1)                              # f32
    # dense all-expert compute, then gather per token
    h = jnp.einsum('td,ehd->eth', x2d, up_w, preferred_element_type=jnp.float32)
    h = (h * jax.nn.sigmoid(h)).astype(x.dtype)
    y = jnp.einsum('eth,edh->etd', h, down_w, preferred_element_type=jnp.float32)
    out = jnp.zeros((T, D), jnp.float32)
    for i in range(top_k):
        sel = y[idx[:, i], jnp.arange(T), :]
        out = out + gw[:, i:i + 1] * sel
    return out.astype(x.dtype).reshape(B, S, D)


# ---------------------------------- main ------------------------------------

if __name__ == "__main__":
    # small, module-consistent shapes
    B, S = 2, 64            # 128 tokens
    IN_DIM = 128            # model dim
    HIDDEN = 256            # expert hidden dim
    NUM_EXPERTS = 8
    TOP_K = 2

    key = jax.random.PRNGKey(0)
    kx, kg, ku, kd = jax.random.split(key, 4)

    # deterministic PyTorch-Linear-style init: U(-1/sqrt(fan_in), 1/sqrt(fan_in))
    def lin_init(k, shape, fan_in):
        bound = 1.0 / (fan_in ** 0.5)
        return jax.random.uniform(k, shape, jnp.float32, -bound, bound).astype(DTYPE)

    x = (jax.random.normal(kx, (B, S, IN_DIM), jnp.float32) * 0.5).astype(DTYPE)
    gate_w = lin_init(kg, (NUM_EXPERTS, IN_DIM), IN_DIM)             # (E, D)
    up_w = lin_init(ku, (NUM_EXPERTS, HIDDEN, IN_DIM), IN_DIM)       # (E, H, D)
    down_w = lin_init(kd, (NUM_EXPERTS, IN_DIM, HIDDEN), HIDDEN)     # (E, D, H)

    # small token tile for the toy problem so several tiles/groups exist
    moe = jax.jit(functools.partial(sparse_moe_forward, top_k=TOP_K, token_tile=64))
    out = jax.block_until_ready(moe(x, gate_w, up_w, down_w))

    ref = jax.block_until_ready(sparse_moe_reference(x, gate_w, up_w, down_w, TOP_K))

    assert out.shape == x.shape and out.dtype == x.dtype
    assert jnp.allclose(out.astype(jnp.float32), ref.astype(jnp.float32),
                        rtol=5e-2, atol=5e-2)
    print("KERNEL_OK")
</pallas_src>

<mosaic_0001>
module attributes {stable_mosaic.version = 11 : i64} {
  func.func private @main(%arg0: i32) attributes {dimension_semantics = [#tpu.dimension_semantics<core_parallel>], iteration_bounds = array<i64: 2>, tpu.core_type = #tpu.core_type<sc_scalar_subcore>, window_params = []} {
    return
  }
}

module attributes {stable_mosaic.version = 11 : i64} {
  func.func private @main(%arg0: i32) attributes {dimension_semantics = [#tpu.dimension_semantics<core_parallel>], iteration_bounds = array<i64: 2>, tpu.core_type = #tpu.core_type<sc_scalar_subcore>, window_params = []} {
    return
  }
}

module attributes {stable_mosaic.version = 11 : i64} {
  func.func @_expert_gmm_kernel(%arg0: i32, %arg1: memref<12xi32, #tpu.memory_space<smem>>, %arg2: memref<64x128xbf16, #tpu.memory_space<vmem>>, %arg3: memref<64x1xf32, #tpu.memory_space<vmem>>, %arg4: memref<1x128x256xbf16, #tpu.memory_space<vmem>>, %arg5: memref<1x256x128xbf16, #tpu.memory_space<vmem>>, %arg6: memref<64x128xbf16, #tpu.memory_space<vmem>>) attributes {dimension_semantics = [#tpu.dimension_semantics<parallel>], iteration_bounds = array<i64: 12>, scalar_prefetch = 1 : i64, scratch_operands = 0 : i64, tpu.core_type = #tpu.core_type<tc>, window_params = [{transform_indices = @transform_0, window_bounds = array<i64: 64, 128>}, {transform_indices = @transform_1, window_bounds = array<i64: 64, 1>}, {transform_indices = @transform_2, window_bounds = array<i64: 1, 128, 256>}, {transform_indices = @transform_3, window_bounds = array<i64: 1, 256, 128>}, {transform_indices = @transform_4, window_bounds = array<i64: 64, 128>}]} {
    %c0 = arith.constant 0 : index
    %c0_0 = arith.constant 0 : index
    %0 = vector.load %arg2[%c0, %c0_0] : memref<64x128xbf16, #tpu.memory_space<vmem>>, vector<64x128xbf16>
    %c0_1 = arith.constant 0 : index
    %c0_2 = arith.constant 0 : index
    %c0_3 = arith.constant 0 : index
    %1 = vector.load %arg4[%c0_1, %c0_2, %c0_3] : memref<1x128x256xbf16, #tpu.memory_space<vmem>>, vector<1x128x256xbf16>
    %2 = vector.shape_cast %1 : vector<1x128x256xbf16> to vector<128x256xbf16>
    %cst = arith.constant dense<0.000000e+00> : vector<64x256xf32>
    %3 = tpu.matmul %0, %2, %cst {dimension_numbers = #tpu.dot_dimension_numbers<[1], [0], [0], [1], [0, 0, 1, 1], [], []>} : vector<64x128xbf16>, vector<128x256xbf16>, vector<64x256xf32> -> vector<64x256xf32>
    %4 = arith.negf %3 : vector<64x256xf32>
    %5 = math.exp %4 : vector<64x256xf32>
    %cst_4 = arith.constant 1.000000e+00 : f32
    %6 = vector.broadcast %cst_4 : f32 to vector<64x256xf32>
    %7 = arith.addf %6, %5 : vector<64x256xf32>
    %8 = arith.divf %6, %7 : vector<64x256xf32>
    %9 = arith.mulf %3, %8 : vector<64x256xf32>
    %10 = arith.truncf %9 : vector<64x256xf32> to vector<64x256xbf16>
    %c0_5 = arith.constant 0 : index
    %c0_6 = arith.constant 0 : index
    %c0_7 = arith.constant 0 : index
    %11 = vector.load %arg5[%c0_5, %c0_6, %c0_7] : memref<1x256x128xbf16, #tpu.memory_space<vmem>>, vector<1x256x128xbf16>
    %12 = vector.shape_cast %11 : vector<1x256x128xbf16> to vector<256x128xbf16>
    %cst_8 = arith.constant dense<0.000000e+00> : vector<64x128xf32>
    %13 = tpu.matmul %10, %12, %cst_8 {dimension_numbers = #tpu.dot_dimension_numbers<[1], [0], [0], [1], [0, 0, 1, 1], [], []>} : vector<64x256xbf16>, vector<256x128xbf16>, vector<64x128xf32> -> vector<64x128xf32>
    %c0_9 = arith.constant 0 : index
    %c0_10 = arith.constant 0 : index
    %14 = vector.load %arg3[%c0_9, %c0_10] : memref<64x1xf32, #tpu.memory_space<vmem>>, vector<64x1xf32>
    %15 = vector.broadcast %14 : vector<64x1xf32> to vector<64x128xf32>
    %16 = arith.mulf %15, %13 : vector<64x128xf32>
    %17 = arith.truncf %16 : vector<64x128xf32> to vector<64x128xbf16>
    %c0_11 = arith.constant 0 : index
    %c0_12 = arith.constant 0 : index
    %18 = vector.load %arg6[%c0_11, %c0_12] : memref<64x128xbf16, #tpu.memory_space<vmem>>, vector<64x128xbf16>
    tpu.vector_store %arg6[%c0_11, %c0_12], %17 {strides = array<i32>} : memref<64x128xbf16, #tpu.memory_space<vmem>>, vector<64x128xbf16>,
    return
  }
  func.func @transform_0(%arg0: i32, %arg1: memref<12xi32, #tpu.memory_space<smem>>) -> (i32, i32) {
    %c0_i32 = arith.constant 0 : i32
    %c0_i32_0 = arith.constant 0 : i32
    return %arg0, %c0_i32 : i32, i32
  }
  func.func @transform_1(%arg0: i32, %arg1: memref<12xi32, #tpu.memory_space<smem>>) -> (i32, i32) {
    %c0_i32 = arith.constant 0 : i32
    %c0_i32_0 = arith.constant 0 : i32
    return %arg0, %c0_i32 : i32, i32
  }
  func.func @transform_2(%arg0: i32, %arg1: memref<12xi32, #tpu.memory_space<smem>>) -> (i32, i32, i32) {
    %0 = arith.index_cast %arg0 : i32 to index
    %1 = memref.load %arg1[%0] : memref<12xi32, #tpu.memory_space<smem>>
    %c0_i32 = arith.constant 0 : i32
    %c0_i32_0 = arith.constant 0 : i32
    %c0_i32_1 = arith.constant 0 : i32
    return %1, %c0_i32, %c0_i32_0 : i32, i32, i32
  }
  func.func @transform_3(%arg0: i32, %arg1: memref<12xi32, #tpu.memory_space<smem>>) -> (i32, i32, i32) {
    %0 = arith.index_cast %arg0 : i32 to index
    %1 = memref.load %arg1[%0] : memref<12xi32, #tpu.memory_space<smem>>
    %c0_i32 = arith.constant 0 : i32
    %c0_i32_0 = arith.constant 0 : i32
    %c0_i32_1 = arith.constant 0 : i32
    return %1, %c0_i32, %c0_i32_0 : i32, i32, i32
  }
  func.func @transform_4(%arg0: i32, %arg1: memref<12xi32, #tpu.memory_space<smem>>) -> (i32, i32) {
    %c0_i32 = arith.constant 0 : i32
    %c0_i32_0 = arith.constant 0 : i32
    return %arg0, %c0_i32 : i32, i32
  }
}

</mosaic_0001>

<llo_original>
// kernel: custom-call
$region0: #{custom-call}
  %s0 = inlined_call_operand.vmem [shape: u32[12], index: 0, kind: output, shape index: {}]

// kernel: sparse_moe_forward.1
$region0: #{sparse_moe_forward.1}
  #allocation0 [shape = 'u32[]', space=smem, size = 0x4, offset = 0x4, fixed_abs, tag = 'smem constant byte address 0x4 - core index']
  #allocation1 [shape = 'u32[144,128]{1,0:T(1,128)}', space=vmem, size = 0x12000, scoped, tag = 'internal scratch']
  #allocation2 [shape = 's32[1]{0}', space=sflag, size = 0x4, scoped, tag = 'scoped memory for sparse_moe_forward.1']
  #allocation3 [shape = 'u8[512]{0}', space=smem, size = 0x200, scoped, tag = 'prefetched SMEM operand 0']
  %s0 = inlined_call_operand.vmem [shape: s32[12], index: 0, kind: input, shape index: {}]
  %s1 = inlined_call_operand.vmem [shape: bf16[768,128], index: 1, kind: input, shape index: {}]
  %s2 = inlined_call_operand.vmem [shape: f32[768,1], index: 2, kind: input, shape index: {}]
  %s3 = inlined_call_operand.vmem [shape: bf16[8,128,256], index: 3, kind: input, shape index: {}]
  %s4 = inlined_call_operand.vmem [shape: bf16[8,256,128], index: 4, kind: input, shape index: {}]
  %s5 = inlined_call_operand.vmem [shape: bf16[768,128], index: 5, kind: output, shape index: {}]
  %s6 = sld [smem:[#allocation0]]
  $region49: #{sparse_moe_forward.1} parent=0
    _
  %s8 = ssub.s32 1, %s6
  %s9 = scalar_select 0, %s8, %s6
  %s10 = sshll.u32 %s0, 4
  %s11 = int_to_ptr.vmem [resolvable:$true] %s10
  %13 = dma.vmem_to_smem %s11, 16, [#allocation3], [#allocation2]
  %14 = dma.done [#allocation2], 16
  %15 = sfence
  loop: start=0, step=1, limit=14
  $region2: #{sparse_moe_forward.1} parent=0 // loop_pre_header
    _
  $region3: #{sparse_moe_forward.1} parent=0 // loop_header
    %s17 = sphi 0, %s21
    %p18 = scmp.ge.s32.totalorder %s17, 14
    %s27 = sphi 0, %s29
    %s30 = sphi 0, %s27
    %s31 = sphi 0, %s30
    %s47 = sphi 0, %s31
    %s53 = sphi 0, %s55
    %s56 = sphi 0, %s53
    %s57 = sphi 0, %s56
    %s73 = sphi 0, %s57
    %s81 = sphi 0, %s83
    %s84 = sphi 0, %s81
    %s85 = sphi 0, %s84
    %s101 = sphi 0, %s85
    %s109 = sphi 0, %s111
    %s112 = sphi 0, %s109
    %s113 = sphi 0, %s112
    %s129 = sphi 0, %s113
    %s135 = sphi 0, %s137
    %s138 = sphi 0, %s135
    %s139 = sphi 0, %s138
    %s155 = sphi 0, %s139
  $region4: #{sparse_moe_forward.1} parent=0 // loop_header_branch
    %20 = sbr.rel (%p18) target = $region8
  $region5: #{sparse_moe_forward.1} parent=0 // loop_body
    %s22 = ssub.s32 %s17, 1
    %s23 = ssub.s32 %s17, 2
    %s24 = sadd.s32 %s17, 1
    %s25 = ssub.s32 %s17, %s24
    %p26 = scmp.eq.s32.totalorder %s25, 0
    %s28 = sadd.s32 %s27, 1
    %s29 = scalar_select %p26, %s27, %s28
    %p32 = pneg %p26
    %p33 = scmp.eq.s32.totalorder %s17, 11
    %p34 = por %p32, %p33
    %p35 = scmp.ne.s32.totalorder %s27, %s30
    %p36 = scmp.eq.s32.totalorder %s17, 0
    %p37 = por %p35, %p36
    %p38 = scmp.ne.s32.totalorder %s27, %s30
    %p39 = scmp.eq.s32.totalorder %s22, 11
    %p40 = por %p38, %p39
    %p41 = scmp.ne.s32.totalorder %s30, %s31
    %p42 = scmp.eq.s32.totalorder %s22, 0
    %p43 = por %p41, %p42
    %p44 = scmp.ne.s32.totalorder %s30, %s31
    %p45 = scmp.eq.s32.totalorder %s23, 11
    %p46 = por %p44, %p45
    %p48 = scmp.ne.s32.totalorder %s31, %s47
    %p49 = scmp.eq.s32.totalorder %s23, 0
    %p50 = por %p48, %p49
    %s51 = ssub.s32 %s17, %s24
    %p52 = scmp.eq.s32.totalorder %s51, 0
    %s54 = sadd.s32 %s53, 1
    %s55 = scalar_select %p52, %s53, %s54
    %p58 = pneg %p52
    %p59 = scmp.eq.s32.totalorder %s17, 11
    %p60 = por %p58, %p59
    %p61 = scmp.ne.s32.totalorder %s53, %s56
    %p62 = scmp.eq.s32.totalorder %s17, 0
    %p63 = por %p61, %p62
    %p64 = scmp.ne.s32.totalorder %s53, %s56
    %p65 = scmp.eq.s32.totalorder %s22, 11
    %p66 = por %p64, %p65
    %p67 = scmp.ne.s32.totalorder %s56, %s57
    %p68 = scmp.eq.s32.totalorder %s22, 0
    %p69 = por %p67, %p68
    %p70 = scmp.ne.s32.totalorder %s56, %s57
    %p71 = scmp.eq.s32.totalorder %s23, 11
    %p72 = por %p70, %p71
    %p74 = scmp.ne.s32.totalorder %s57, %s73
    %p75 = scmp.eq.s32.totalorder %s23, 0
    %p76 = por %p74, %p75
    %s77 = sld [smem:[#allocation3 + %s17]]
    %s78 = sld [smem:[#allocation3 + %s24]]
    %s79 = ssub.s32 %s77, %s78
    %p80 = scmp.eq.s32.totalorder %s79, 0
    %s82 = sadd.s32 %s81, 1
    %s83 = scalar_select %p80, %s81, %s82
    %p86 = pneg %p80
    %p87 = scmp.eq.s32.totalorder %s17, 11
    %p88 = por %p86, %p87
    %p89 = scmp.ne.s32.totalorder %s81, %s84
    %p90 = scmp.eq.s32.totalorder %s17, 0
    %p91 = por %p89, %p90
    %p92 = scmp.ne.s32.totalorder %s81, %s84
    %p93 = scmp.eq.s32.totalorder %s22, 11
    %p94 = por %p92, %p93
    %p95 = scmp.ne.s32.totalorder %s84, %s85
    %p96 = scmp.eq.s32.totalorder %s22, 0
    %p97 = por %p95, %p96
    %p98 = scmp.ne.s32.totalorder %s84, %s85
    %p99 = scmp.eq.s32.totalorder %s23, 11
    %p100 = por %p98, %p99
    %p102 = scmp.ne.s32.totalorder %s85, %s101
    %p103 = scmp.eq.s32.totalorder %s23, 0
    %p104 = por %p102, %p103
    %s105 = sld [smem:[#allocation3 + %s17]]
    %s106 = sld [smem:[#allocation3 + %s24]]
    %s107 = ssub.s32 %s105, %s106
    %p108 = scmp.eq.s32.totalorder %s107, 0
    %s110 = sadd.s32 %s109, 1
    %s111 = scalar_select %p108, %s109, %s110
    %p114 = pneg %p108
    %p115 = scmp.eq.s32.totalorder %s17, 11
    %p116 = por %p114, %p115
    %p117 = scmp.ne.s32.totalorder %s109, %s112
    %p118 = scmp.eq.s32.totalorder %s17, 0
    %p119 = por %p117, %p118
    %p120 = scmp.ne.s32.totalorder %s109, %s112
    %p121 = scmp.eq.s32.totalorder %s22, 11
    %p122 = por %p120, %p121
    %p123 = scmp.ne.s32.totalorder %s112, %s113
    %p124 = scmp.eq.s32.totalorder %s22, 0
    %p125 = por %p123, %p124
    %p126 = scmp.ne.s32.totalorder %s112, %s113
    %p127 = scmp.eq.s32.totalorder %s23, 11
    %p128 = por %p126, %p127
    %p130 = scmp.ne.s32.totalorder %s113, %s129
    %p131 = scmp.eq.s32.totalorder %s23, 0
    %p132 = por %p130, %p131
    %s133 = ssub.s32 %s17, %s24
    %p134 = scmp.eq.s32.totalorder %s133, 0
    %s136 = sadd.s32 %s135, 1
    %s137 = scalar_select %p134, %s135, %s136
    %p140 = pneg %p134
    %p141 = scmp.eq.s32.totalorder %s17, 11
    %p142 = por %p140, %p141
    %p143 = scmp.ne.s32.totalorder %s135, %s138
    %p144 = scmp.eq.s32.totalorder %s17, 0
    %p145 = por %p143, %p144
    %p146 = scmp.ne.s32.totalorder %s135, %s138
    %p147 = scmp.eq.s32.totalorder %s22, 11
    %p148 = por %p146, %p147
    %p149 = scmp.ne.s32.totalorder %s138, %s139
    %p150 = scmp.eq.s32.totalorder %s22, 0
    %p151 = por %p149, %p150
    %p152 = scmp.ne.s32.totalorder %s138, %s139
    %p153 = scmp.eq.s32.totalorder %s23, 11
    %p154 = por %p152, %p153
    %p156 = scmp.ne.s32.totalorder %s139, %s155
    %p157 = scmp.eq.s32.totalorder %s23, 0
    %p158 = por %p156, %p157
    %p159 = scmp.le.s32.totalorder 1, %s17
    %p160 = scmp.lt.s32.totalorder %s17, 13
    %p161 = pnand %p159, %p160
    %p162 = pneg %p161
    // Predicated region
    $region9: #{sparse_moe_forward.1} parent=5 // pred_check
      _
    $region10: #{sparse_moe_forward.1} parent=5 // pred_check_branch
      %164 = sbr.rel (%p161) target = $region12
    $region11: #{sparse_moe_forward.1} parent=5 // pred_region
      %s165 = ssub.s32 %s17, 1
    $region12: #{sparse_moe_forward.1} parent=5 // pred_fallthru
      _
    %p166 = scmp.lt.s32.totalorder %s17, 12
    // Predicated region
    $region13: #{sparse_moe_forward.1} parent=5 // pred_check
      %p167 = pneg %p166
    $region14: #{sparse_moe_forward.1} parent=5 // pred_check_branch
      %169 = sbr.rel (%p167) target = $region16
    $region15: #{sparse_moe_forward.1} parent=5 // pred_region
      // Predicated region
      $region17: #{sparse_moe_forward.1} parent=15 // pred_check
        %p170 = pneg %p37
      $region18: #{sparse_moe_forward.1} parent=15 // pred_check_branch
        %172 = sbr.rel (%p170) target = $region20
      $region19: #{sparse_moe_forward.1} parent=15 // pred_region
        %s173 = smul.u32 8, %s17
        %p174 = scmp.lt.s32.totalorder %s173, 95
        %s175 = scalar_select %p174, %s173, 95
        %s176 = smul.addr %s175, 4
        %s177 = scalar_lea.vmem %s1, %s176
        %s178 = smul.u32 8, %s17
      $region20: #{sparse_moe_forward.1} parent=15 // pred_fallthru
        _
      // Predicated region
      $region21: #{sparse_moe_forward.1} parent=15 // pred_check
        %p179 = pneg %p63
      $region22: #{sparse_moe_forward.1} parent=15 // pred_check_branch
        %181 = sbr.rel (%p179) target = $region24
      $region23: #{sparse_moe_forward.1} parent=15 // pred_region
        %s182 = smul.u32 8, %s17
        %p183 = scmp.lt.s32.totalorder %s182, 95
        %s184 = scalar_select %p183, %s182, 95
        %s185 = smul.addr %s184, 8
        %s186 = scalar_lea.vmem %s2, %s185
        %s187 = smul.u32 8, %s17
      $region24: #{sparse_moe_forward.1} parent=15 // pred_fallthru
        _
      // Predicated region
      $region25: #{sparse_moe_forward.1} parent=15 // pred_check
        %p188 = pneg %p91
      $region26: #{sparse_moe_forward.1} parent=15 // pred_check_branch
        %190 = sbr.rel (%p188) target = $region28
      $region27: #{sparse_moe_forward.1} parent=15 // pred_region
        %s191 = sld [smem:[#allocation3 + %s17]]
        %p192 = scmp.lt.s32.totalorder %s191, 7
        %s193 = scalar_select %p192, %s191, 7
        %s194 = smul.addr %s193, 32
        %s195 = smul.addr %s194, 4
        %s196 = scalar_lea.vmem %s3, %s195
        %s197 = sld [smem:[#allocation3 + %s17]]
      $region28: #{sparse_moe_forward.1} parent=15 // pred_fallthru
        _
      // Predicated region
      $region29: #{sparse_moe_forward.1} parent=15 // pred_check
        %p198 = pneg %p119
      $region30: #{sparse_moe_forward.1} parent=15 // pred_check_branch
        %200 = sbr.rel (%p198) target = $region32
      $region31: #{sparse_moe_forward.1} parent=15 // pred_region
        %s201 = sld [smem:[#allocation3 + %s17]]
        %p202 = scmp.lt.s32.totalorder %s201, 7
        %s203 = scalar_select %p202, %s201, 7
        %s204 = smul.addr %s203, 32
        %s205 = smul.addr %s204, 4
        %s206 = scalar_lea.vmem %s4, %s205
        %s207 = sld [smem:[#allocation3 + %s17]]
      $region32: #{sparse_moe_forward.1} parent=15 // pred_fallthru
        _
    $region16: #{sparse_moe_forward.1} parent=5 // pred_fallthru
      _
    %p208 = scmp.le.s32.totalorder 1, %s17
    %p209 = scmp.lt.s32.totalorder %s17, 13
    %p210 = pnand %p208, %p209
    %p211 = pneg %p210
    // Predicated region
    $region33: #{sparse_moe_forward.1} parent=5 // pred_check
      _
    $region34: #{sparse_moe_forward.1} parent=5 // pred_check_branch
      %213 = sbr.rel (%p210) target = $region36
    $region35: #{sparse_moe_forward.1} parent=5 // pred_region
      %s214 = ssub.s32 %s17, 1
      %s215 = smul.u32 8, %s22
      %p216 = scmp.lt.s32.totalorder %s215, 95
      %s217 = scalar_select %p216, %s215, 95
      %s218 = smul.addr %s217, 4
      %s219 = scalar_lea.vmem %s1, %s218
      %p220 = pneg %p43
      %p221 = pneg %p40
      %s222 = smul.u32 8, %s22
      %p223 = scmp.lt.s32.totalorder %s222, 95
      %s224 = scalar_select %p223, %s222, 95
      %s225 = smul.addr %s224, 8
      %s226 = scalar_lea.vmem %s2, %s225
      %p227 = pneg %p69
      %p228 = pneg %p66
      %s229 = sld [smem:[#allocation3 + %s22]]
      %p230 = scmp.lt.s32.totalorder %s229, 7
      %s231 = scalar_select %p230, %s229, 7
      %s232 = smul.addr %s231, 32
      %s233 = smul.addr %s232, 4
      %s234 = scalar_lea.vmem %s3, %s233
      %p235 = pneg %p97
      %p236 = pneg %p94
      %s237 = sld [smem:[#allocation3 + %s22]]
      %p238 = scmp.lt.s32.totalorder %s237, 7
      %s239 = scalar_select %p238, %s237, 7
      %s240 = smul.addr %s239, 32
      %s241 = smul.addr %s240, 4
      %s242 = scalar_lea.vmem %s4, %s241
      %p243 = pneg %p125
      %p244 = pneg %p122
      %p245 = pneg %p151
      %p246 = pneg %p148
      %s247 = smul.u32 8, %s22
      %p248 = scmp.lt.s32.totalorder %s247, 95
      %s249 = scalar_select %p248, %s247, 95
      %s250 = smul.addr %s249, 4
      %s251 = scalar_lea.vmem %s5, %s250
      %s252 = smul.u32 8, %s22
      %p253 = scmp.lt.s32.totalorder %s252, 95
      %s254 = scalar_select %p253, %s252, 95
      %s255 = smul.addr %s254, 4
      %s256 = scalar_lea.vmem %s1, %s255
      %s257 = smul.u32 8, %s22
      %s258 = smul.u32 8, %s22
      %p259 = scmp.lt.s32.totalorder %s258, 95
      %s260 = scalar_select %p259, %s258, 95
      %s261 = smul.addr %s260, 8
      %s262 = scalar_lea.vmem %s2, %s261
      %s263 = smul.u32 8, %s22
      %s264 = sld [smem:[#allocation3 + %s22]]
      %p265 = scmp.lt.s32.totalorder %s264, 7
      %s266 = scalar_select %p265, %s264, 7
      %s267 = smul.addr %s266, 32
      %s268 = smul.addr %s267, 4
      %s269 = scalar_lea.vmem %s3, %s268
      %s270 = sld [smem:[#allocation3 + %s22]]
      %s271 = sld [smem:[#allocation3 + %s22]]
      %p272 = scmp.lt.s32.totalorder %s271, 7
      %s273 = scalar_select %p272, %s271, 7
      %s274 = smul.addr %s273, 32
      %s275 = smul.addr %s274, 4
      %s276 = scalar_lea.vmem %s4, %s275
      %s277 = sld [smem:[#allocation3 + %s22]]
      %s278 = smul.u32 8, %s22
      %p279 = scmp.lt.s32.totalorder %s278, 95
      %s280 = scalar_select %p279, %s278, 95
      %s281 = smul.addr %s280, 4
      %s282 = scalar_lea.vmem %s5, %s281
      %s283 = smul.u32 8, %s22
      %v285 = vld [vmem:[%s256] sm:$0xf]
      %v286 = vld [vmem:[%s256 + $0x4] sm:$0xf]
      %v287 = vld [vmem:[%s256 + $0x8] sm:$0xf]
      %v288 = vld [vmem:[%s256 + $0xc] sm:$0xf]
      %v289 = vld [vmem:[%s256 + $0x10] sm:$0xf]
      %v290 = vld [vmem:[%s256 + $0x14] sm:$0xf]
      %v291 = vld [vmem:[%s256 + $0x18] sm:$0xf]
      %v292 = vld [vmem:[%s256 + $0x1c] sm:$0xf]
      %v293 = vld [vmem:[%s269] sm:$0xff]
      %v294 = vld [vmem:[%s269 + $0x8] sm:$0xff]
      %v295 = vld [vmem:[%s269 + $0x10] sm:$0xff]
      %v296 = vld [vmem:[%s269 + $0x18] sm:$0xff]
      %v297 = vld [vmem:[%s269 + $0x20] sm:$0xff]
      %v298 = vld [vmem:[%s269 + $0x28] sm:$0xff]
      %v299 = vld [vmem:[%s269 + $0x30] sm:$0xff]
      %v300 = vld [vmem:[%s269 + $0x38] sm:$0xff]
      %v301 = vld [vmem:[%s269 + $0x40] sm:$0xff]
      %v302 = vld [vmem:[%s269 + $0x48] sm:$0xff]
      %v303 = vld [vmem:[%s269 + $0x50] sm:$0xff]
      %v304 = vld [vmem:[%s269 + $0x58] sm:$0xff]
      %v305 = vld [vmem:[%s269 + $0x60] sm:$0xff]
      %v306 = vld [vmem:[%s269 + $0x68] sm:$0xff]
      %v307 = vld [vmem:[%s269 + $0x70] sm:$0xff]
      %v308 = vld [vmem:[%s269 + $0x78] sm:$0xff]
      %v317 = vunpack.c.l.b16 %v285
      %v318 = vunpack.c.l.b16 %v286
      %v319 = vunpack.c.l.b16 %v287
      %v320 = vunpack.c.l.b16 %v288
      %v321 = vunpack.c.l.b16 %v289
      %v322 = vunpack.c.l.b16 %v290
      %v323 = vunpack.c.l.b16 %v291
      %v324 = vunpack.c.l.b16 %v292
      %v325 = vpack.c.b16 %v318, %v317
      %v326 = vpack.c.b16 %v320, %v319
      %v327 = vpack.c.b16 %v322, %v321
      %v328 = vpack.c.b16 %v324, %v323
      %v349 = vunpack.c.l.b16 %v293
      %v350 = vunpack.c.h.b16 %v293
      %v351 = vunpack.c.l.b16 %v294
      %v352 = vunpack.c.h.b16 %v294
      %v353 = vunpack.c.l.b16 %v295
      %v354 = vunpack.c.h.b16 %v295
      %v355 = vunpack.c.l.b16 %v296
      %v356 = vunpack.c.h.b16 %v296
      %v357 = vunpack.c.l.b16 %v297
      %v358 = vunpack.c.h.b16 %v297
      %v359 = vunpack.c.l.b16 %v298
      %v360 = vunpack.c.h.b16 %v298
      %v361 = vunpack.c.l.b16 %v299
      %v362 = vunpack.c.h.b16 %v299
      %v363 = vunpack.c.l.b16 %v300
      %v364 = vunpack.c.h.b16 %v300
      %v365 = vunpack.c.l.b16 %v301
      %v366 = vunpack.c.h.b16 %v301
      %v367 = vunpack.c.l.b16 %v302
      %v368 = vunpack.c.h.b16 %v302
      %v369 = vunpack.c.l.b16 %v303
      %v370 = vunpack.c.h.b16 %v303
      %v371 = vunpack.c.l.b16 %v304
      %v372 = vunpack.c.h.b16 %v304
      %v373 = vunpack.c.l.b16 %v305
      %v374 = vunpack.c.h.b16 %v305
      %v375 = vunpack.c.l.b16 %v306
      %v376 = vunpack.c.h.b16 %v306
      %v377 = vunpack.c.l.b16 %v307
      %v378 = vunpack.c.h.b16 %v307
      %v379 = vunpack.c.l.b16 %v308
      %v380 = vunpack.c.h.b16 %v308
      %v381 = vpack.c.b16 %v351, %v349
      %v382 = vpack.c.b16 %v352, %v350
      %v383 = vpack.c.b16 %v355, %v353
      %v384 = vpack.c.b16 %v356, %v354
      %v385 = vpack.c.b16 %v359, %v357
      %v386 = vpack.c.b16 %v360, %v358
      %v387 = vpack.c.b16 %v363, %v361
      %v388 = vpack.c.b16 %v364, %v362
      %v389 = vpack.c.b16 %v367, %v365
      %v390 = vpack.c.b16 %v368, %v366
      %v391 = vpack.c.b16 %v371, %v369
      %v392 = vpack.c.b16 %v372, %v370
      %v393 = vpack.c.b16 %v375, %v373
      %v394 = vpack.c.b16 %v376, %v374
      %v395 = vpack.c.b16 %v379, %v377
      %v396 = vpack.c.b16 %v380, %v378
      %413 = vmatprep.subr.bf16.mxu0 %v382
      %414 = vmatpush1.bf16.msra.mxu0 %v381
      %415 = vmatprep.subr.bf16.mxu0 %v384
      %416 = vmatpush1.bf16.msra.mxu0 %v383
      %417 = vmatprep.subr.bf16.mxu0 %v386
      %418 = vmatpush1.bf16.msra.mxu0 %v385
      %419 = vmatprep.subr.bf16.mxu0 %v388
      %420 = vmatpush1.bf16.msra.mxu0 %v387
      %421 = vmatprep.subr.bf16.mxu0 %v390
      %422 = vmatpush1.bf16.msra.mxu0 %v389
      %423 = vmatprep.subr.bf16.mxu0 %v392
      %424 = vmatpush1.bf16.msra.mxu0 %v391
      %425 = vmatprep.subr.bf16.mxu0 %v394
      %426 = vmatpush1.bf16.msra.mxu0 %v393
      %427 = vmatprep.subr.bf16.mxu0 %v396
      %428 = vmatpush1.bf16.msra.mxu0 %v395
      %429 = vmatprep.subr.bf16.mxu0 0
      %430 = vmatpush1.bf16.msra.mxu0 0
      %431 = vmatprep.subr.bf16.mxu0 0
      %432 = vmatpush1.bf16.msra.mxu0 0
      %433 = vmatprep.subr.bf16.mxu0 0
      %434 = vmatpush1.bf16.msra.mxu0 0
      %435 = vmatprep.subr.bf16.mxu0 0
      %436 = vmatpush1.bf16.msra.mxu0 0
      %437 = vmatprep.subr.bf16.mxu0 0
      %438 = vmatpush1.bf16.msra.mxu0 0
      %439 = vmatprep.subr.bf16.mxu0 0
      %440 = vmatpush1.bf16.msra.mxu0 0
      %441 = vmatprep.subr.bf16.mxu0 0
      %442 = vmatpush1.bf16.msra.mxu0 0
      %443 = vmatprep.subr.bf16.mxu0 0
      %444 = vmatpush1.bf16.msra.mxu0 0
      %445 = vmatprep.mubr.bf16.mxu0 0
      %446 = vmatmul.mubr.bf16.gmra.mrb[0].mxu0 %v325
      %v447 = vpop.f32.mrb[0].mxu0
      %v448 = vadd.f32 0.0, %v447
      %v449 = vpop.f32.mrb[0].mxu0
      %v450 = vadd.f32 0.0, %v449
      %v451 = vpop.f32.mrb[0].mxu0
      %v452 = vadd.f32 0.0, %v451
      %v453 = vpop.f32.mrb[0].mxu0
      %v454 = vadd.f32 0.0, %v453
      %455 = vmatprep.mubr.bf16.mxu0 0
      %456 = vmatmul.mubr.bf16.gmra.mrb[0].mxu0 %v326
      %v457 = vpop.f32.mrb[0].mxu0
      %v458 = vadd.f32 0.0, %v457
      %v459 = vpop.f32.mrb[0].mxu0
      %v460 = vadd.f32 0.0, %v459
      %v461 = vpop.f32.mrb[0].mxu0
      %v462 = vadd.f32 0.0, %v461
      %v463 = vpop.f32.mrb[0].mxu0
      %v464 = vadd.f32 0.0, %v463
      %465 = vmatprep.mubr.bf16.mxu0 0
      %466 = vmatmul.mubr.bf16.gmra.mrb[0].mxu0 %v327
      %v467 = vpop.f32.mrb[0].mxu0
      %v468 = vadd.f32 0.0, %v467
      %v469 = vpop.f32.mrb[0].mxu0
      %v470 = vadd.f32 0.0, %v469
      %v471 = vpop.f32.mrb[0].mxu0
      %v472 = vadd.f32 0.0, %v471
      %v473 = vpop.f32.mrb[0].mxu0
      %v474 = vadd.f32 0.0, %v473
      %475 = vmatprep.mubr.bf16.mxu0 0
      %476 = vmatmul.mubr.bf16.gmra.mrb[0].mxu0 %v328
      %v477 = vpop.f32.mrb[0].mxu0
      %v478 = vadd.f32 0.0, %v477
      %v479 = vpop.f32.mrb[0].mxu0
      %v480 = vadd.f32 0.0, %v479
      %v481 = vpop.f32.mrb[0].mxu0
      %v482 = vadd.f32 0.0, %v481
      %v483 = vpop.f32.mrb[0].mxu0
      %v484 = vadd.f32 0.0, %v483
      %485 = vdwg.mxu0
      %v486 = vxor.u32 %v448, 2147483648
      %v487 = vxor.u32 %v450, 2147483648
      %v488 = vxor.u32 %v452, 2147483648
      %v489 = vxor.u32 %v454, 2147483648
      %v490 = vxor.u32 %v458, 2147483648
      %v491 = vxor.u32 %v460, 2147483648
      %v492 = vxor.u32 %v462, 2147483648
      %v493 = vxor.u32 %v464, 2147483648
      %v494 = vxor.u32 %v468, 2147483648
      %v495 = vxor.u32 %v470, 2147483648
      %v496 = vxor.u32 %v472, 2147483648
      %v497 = vxor.u32 %v474, 2147483648
      %v498 = vxor.u32 %v478, 2147483648
      %v499 = vxor.u32 %v480, 2147483648
      %v500 = vxor.u32 %v482, 2147483648
      %v501 = vxor.u32 %v484, 2147483648
      %v502 = vmul.f32 %v486, 1.442695
      %v503 = vpow.pop %v502
      %v504 = vmul.f32 %v487, 1.442695
      %v505 = vpow.pop %v504
      %v506 = vmul.f32 %v488, 1.442695
      %v507 = vpow.pop %v506
      %v508 = vmul.f32 %v489, 1.442695
      %v509 = vpow.pop %v508
      %v510 = vmul.f32 %v490, 1.442695
      %v511 = vpow.pop %v510
      %v512 = vmul.f32 %v491, 1.442695
      %v513 = vpow.pop %v512
      %v514 = vmul.f32 %v492, 1.442695
      %v515 = vpow.pop %v514
      %v516 = vmul.f32 %v493, 1.442695
      %v517 = vpow.pop %v516
      %v518 = vmul.f32 %v494, 1.442695
      %v519 = vpow.pop %v518
      %v520 = vmul.f32 %v495, 1.442695
      %v521 = vpow.pop %v520
      %v522 = vmul.f32 %v496, 1.442695
      %v523 = vpow.pop %v522
      %v524 = vmul.f32 %v497, 1.442695
      %v525 = vpow.pop %v524
      %v526 = vmul.f32 %v498, 1.442695
      %v527 = vpow.pop %v526
      %v528 = vmul.f32 %v499, 1.442695
      %v529 = vpow.pop %v528
      %v530 = vmul.f32 %v500, 1.442695
      %v531 = vpow.pop %v530
      %v532 = vmul.f32 %v501, 1.442695
      %v533 = vpow.pop %v532
      %v534 = vadd.f32 %v503, 1.0
      %v535 = vadd.f32 %v505, 1.0
      %v536 = vadd.f32 %v507, 1.0
      %v537 = vadd.f32 %v509, 1.0
      %v538 = vadd.f32 %v511, 1.0
      %v539 = vadd.f32 %v513, 1.0
      %v540 = vadd.f32 %v515, 1.0
      %v541 = vadd.f32 %v517, 1.0
      %v542 = vadd.f32 %v519, 1.0
      %v543 = vadd.f32 %v521, 1.0
      %v544 = vadd.f32 %v523, 1.0
      %v545 = vadd.f32 %v525, 1.0
      %v546 = vadd.f32 %v527, 1.0
      %v547 = vadd.f32 %v529, 1.0
      %v548 = vadd.f32 %v531, 1.0
      %v549 = vadd.f32 %v533, 1.0
      %v550 = vrcp.pop %v534
      %v551 = vmul.f32 1.0, %v550
      %v552 = vrcp.pop %v535
      %v553 = vmul.f32 1.0, %v552
      %v554 = vrcp.pop %v536
      %v555 = vmul.f32 1.0, %v554
      %v556 = vrcp.pop %v537
      %v557 = vmul.f32 1.0, %v556
      %v558 = vrcp.pop %v538
      %v559 = vmul.f32 1.0, %v558
      %v560 = vrcp.pop %v539
      %v561 = vmul.f32 1.0, %v560
      %v562 = vrcp.pop %v540
      %v563 = vmul.f32 1.0, %v562
      %v564 = vrcp.pop %v541
      %v565 = vmul.f32 1.0, %v564
      %v566 = vrcp.pop %v542
      %v567 = vmul.f32 1.0, %v566
      %v568 = vrcp.pop %v543
      %v569 = vmul.f32 1.0, %v568
      %v570 = vrcp.pop %v544
      %v571 = vmul.f32 1.0, %v570
      %v572 = vrcp.pop %v545
      %v573 = vmul.f32 1.0, %v572
      %v574 = vrcp.pop %v546
      %v575 = vmul.f32 1.0, %v574
      %v576 = vrcp.pop %v547
      %v577 = vmul.f32 1.0, %v576
      %v578 = vrcp.pop %v548
      %v579 = vmul.f32 1.0, %v578
      %v580 = vrcp.pop %v549
      %v581 = vmul.f32 1.0, %v580
      %v582 = vmul.f32 %v448, %v551
      %v583 = vmul.f32 %v450, %v553
      %v584 = vmul.f32 %v452, %v555
      %v585 = vmul.f32 %v454, %v557
      %v586 = vmul.f32 %v458, %v559
      %v587 = vmul.f32 %v460, %v561
      %v588 = vmul.f32 %v462, %v563
      %v589 = vmul.f32 %v464, %v565
      %v590 = vmul.f32 %v468, %v567
      %v591 = vmul.f32 %v470, %v569
      %v592 = vmul.f32 %v472, %v571
      %v593 = vmul.f32 %v474, %v573
      %v594 = vmul.f32 %v478, %v575
      %v595 = vmul.f32 %v480, %v577
      %v596 = vmul.f32 %v482, %v579
      %v597 = vmul.f32 %v484, %v581
      %v598 = vpack.c.bf16 %v584, %v582
      %v599 = vpack.c.bf16 %v585, %v583
      %v600 = vpack.c.bf16 %v588, %v586
      %v601 = vpack.c.bf16 %v589, %v587
      %v602 = vpack.c.bf16 %v592, %v590
      %v603 = vpack.c.bf16 %v593, %v591
      %v604 = vpack.c.bf16 %v596, %v594
      %v605 = vpack.c.bf16 %v597, %v595
      %v606 = vld [vmem:[%s276] sm:$0xf]
      %v607 = vld [vmem:[%s276 + $0x4] sm:$0xf]
      %v608 = vld [vmem:[%s276 + $0x8] sm:$0xf]
      %v609 = vld [vmem:[%s276 + $0xc] sm:$0xf]
      %v610 = vld [vmem:[%s276 + $0x10] sm:$0xf]
      %v611 = vld [vmem:[%s276 + $0x14] sm:$0xf]
      %v612 = vld [vmem:[%s276 + $0x18] sm:$0xf]
      %v613 = vld [vmem:[%s276 + $0x1c] sm:$0xf]
      %v614 = vld [vmem:[%s276 + $0x20] sm:$0xf]
      %v615 = vld [vmem:[%s276 + $0x24] sm:$0xf]
      %v616 = vld [vmem:[%s276 + $0x28] sm:$0xf]
      %v617 = vld [vmem:[%s276 + $0x2c] sm:$0xf]
      %v618 = vld [vmem:[%s276 + $0x30] sm:$0xf]
      %v619 = vld [vmem:[%s276 + $0x34] sm:$0xf]
      %v620 = vld [vmem:[%s276 + $0x38] sm:$0xf]
      %v621 = vld [vmem:[%s276 + $0x3c] sm:$0xf]
      %v622 = vld [vmem:[%s276 + $0x40] sm:$0xf]
      %v623 = vld [vmem:[%s276 + $0x44] sm:$0xf]
      %v624 = vld [vmem:[%s276 + $0x48] sm:$0xf]
      %v625 = vld [vmem:[%s276 + $0x4c] sm:$0xf]
      %v626 = vld [vmem:[%s276 + $0x50] sm:$0xf]
      %v627 = vld [vmem:[%s276 + $0x54] sm:$0xf]
      %v628 = vld [vmem:[%s276 + $0x58] sm:$0xf]
      %v629 = vld [vmem:[%s276 + $0x5c] sm:$0xf]
      %v630 = vld [vmem:[%s276 + $0x60] sm:$0xf]
      %v631 = vld [vmem:[%s276 + $0x64] sm:$0xf]
      %v632 = vld [vmem:[%s276 + $0x68] sm:$0xf]
      %v633 = vld [vmem:[%s276 + $0x6c] sm:$0xf]
      %v634 = vld [vmem:[%s276 + $0x70] sm:$0xf]
      %v635 = vld [vmem:[%s276 + $0x74] sm:$0xf]
      %v636 = vld [vmem:[%s276 + $0x78] sm:$0xf]
      %v637 = vld [vmem:[%s276 + $0x7c] sm:$0xf]
      %v670 = vunpack.c.l.b16 %v606
      %v671 = vunpack.c.l.b16 %v607
      %v672 = vunpack.c.l.b16 %v608
      %v673 = vunpack.c.l.b16 %v609
      %v674 = vunpack.c.l.b16 %v610
      %v675 = vunpack.c.l.b16 %v611
      %v676 = vunpack.c.l.b16 %v612
      %v677 = vunpack.c.l.b16 %v613
      %v678 = vunpack.c.l.b16 %v614
      %v679 = vunpack.c.l.b16 %v615
      %v680 = vunpack.c.l.b16 %v616
      %v681 = vunpack.c.l.b16 %v617
      %v682 = vunpack.c.l.b16 %v618
      %v683 = vunpack.c.l.b16 %v619
      %v684 = vunpack.c.l.b16 %v620
      %v685 = vunpack.c.l.b16 %v621
      %v686 = vunpack.c.l.b16 %v622
      %v687 = vunpack.c.l.b16 %v623
      %v688 = vunpack.c.l.b16 %v624
      %v689 = vunpack.c.l.b16 %v625
      %v690 = vunpack.c.l.b16 %v626
      %v691 = vunpack.c.l.b16 %v627
      %v692 = vunpack.c.l.b16 %v628
      %v693 = vunpack.c.l.b16 %v629
      %v694 = vunpack.c.l.b16 %v630
      %v695 = vunpack.c.l.b16 %v631
      %v696 = vunpack.c.l.b16 %v632
      %v697 = vunpack.c.l.b16 %v633
      %v698 = vunpack.c.l.b16 %v634
      %v699 = vunpack.c.l.b16 %v635
      %v700 = vunpack.c.l.b16 %v636
      %v701 = vunpack.c.l.b16 %v637
      %v702 = vpack.c.b16 %v671, %v670
      %v703 = vpack.c.b16 %v673, %v672
      %v704 = vpack.c.b16 %v675, %v674
      %v705 = vpack.c.b16 %v677, %v676
      %v706 = vpack.c.b16 %v679, %v678
      %v707 = vpack.c.b16 %v681, %v680
      %v708 = vpack.c.b16 %v683, %v682
      %v709 = vpack.c.b16 %v685, %v684
      %v710 = vpack.c.b16 %v687, %v686
      %v711 = vpack.c.b16 %v689, %v688
      %v712 = vpack.c.b16 %v691, %v690
      %v713 = vpack.c.b16 %v693, %v692
      %v714 = vpack.c.b16 %v695, %v694
      %v715 = vpack.c.b16 %v697, %v696
      %v716 = vpack.c.b16 %v699, %v698
      %v717 = vpack.c.b16 %v701, %v700
      %734 = vmatprep.subr.bf16.mxu0 0
      %735 = vmatpush1.bf16.msra.mxu0 %v702
      %736 = vmatprep.subr.bf16.mxu0 0
      %737 = vmatpush1.bf16.msra.mxu0 %v703
      %738 = vmatprep.subr.bf16.mxu0 0
      %739 = vmatpush1.bf16.msra.mxu0 %v704
      %740 = vmatprep.subr.bf16.mxu0 0
      %741 = vmatpush1.bf16.msra.mxu0 %v705
      %742 = vmatprep.subr.bf16.mxu0 0
      %743 = vmatpush1.bf16.msra.mxu0 %v706
      %744 = vmatprep.subr.bf16.mxu0 0
      %745 = vmatpush1.bf16.msra.mxu0 %v707
      %746 = vmatprep.subr.bf16.mxu0 0
      %747 = vmatpush1.bf16.msra.mxu0 %v708
      %748 = vmatprep.subr.bf16.mxu0 0
      %749 = vmatpush1.bf16.msra.mxu0 %v709
      %750 = vmatprep.subr.bf16.mxu0 0
      %751 = vmatpush1.bf16.msra.mxu0 %v710
      %752 = vmatprep.subr.bf16.mxu0 0
      %753 = vmatpush1.bf16.msra.mxu0 %v711
      %754 = vmatprep.subr.bf16.mxu0 0
      %755 = vmatpush1.bf16.msra.mxu0 %v712
      %756 = vmatprep.subr.bf16.mxu0 0
      %757 = vmatpush1.bf16.msra.mxu0 %v713
      %758 = vmatprep.subr.bf16.mxu0 0
      %759 = vmatpush1.bf16.msra.mxu0 %v714
      %760 = vmatprep.subr.bf16.mxu0 0
      %761 = vmatpush1.bf16.msra.mxu0 %v715
      %762 = vmatprep.subr.bf16.mxu0 0
      %763 = vmatpush1.bf16.msra.mxu0 %v716
      %764 = vmatprep.subr.bf16.mxu0 0
      %765 = vmatpush1.bf16.msra.mxu0 %v717
      %766 = vmatprep.mubr.bf16.mxu0 %v599
      %767 = vmatmul.mubr.bf16.gmra.mrb[0].mxu0 %v598
      %v768 = vpop.f32.mrb[0].mxu0
      %v769 = vadd.f32 0.0, %v768
      %v770 = vpop.f32.mrb[0].mxu0
      %v771 = vpop.f32.mrb[0].mxu0
      %v772 = vadd.f32 0.0, %v771
      %v773 = vpop.f32.mrb[0].mxu0
      %774 = vmatprep.mubr.bf16.mxu0 %v601
      %775 = vmatmul.mubr.bf16.gmra.mrb[0].mxu0 %v600
      %v776 = vpop.f32.mrb[0].mxu0
      %v777 = vadd.f32 0.0, %v776
      %v778 = vpop.f32.mrb[0].mxu0
      %v779 = vpop.f32.mrb[0].mxu0
      %v780 = vadd.f32 0.0, %v779
      %v781 = vpop.f32.mrb[0].mxu0
      %782 = vmatprep.mubr.bf16.mxu0 %v603
      %783 = vmatmul.mubr.bf16.gmra.mrb[0].mxu0 %v602
      %v784 = vpop.f32.mrb[0].mxu0
      %v785 = vadd.f32 0.0, %v784
      %v786 = vpop.f32.mrb[0].mxu0
      %v787 = vpop.f32.mrb[0].mxu0
      %v788 = vadd.f32 0.0, %v787
      %v789 = vpop.f32.mrb[0].mxu0
      %790 = vmatprep.mubr.bf16.mxu0 %v605
      %791 = vmatmul.mubr.bf16.gmra.mrb[0].mxu0 %v604
      %v792 = vpop.f32.mrb[0].mxu0
      %v793 = vadd.f32 0.0, %v792
      %v794 = vpop.f32.mrb[0].mxu0
      %v795 = vpop.f32.mrb[0].mxu0
      %v796 = vadd.f32 0.0, %v795
      %v797 = vpop.f32.mrb[0].mxu0
      %798 = vdwg.mxu0
      %v799 = vld [vmem:[%s262] sm:$0xff]
      %v800 = vld [vmem:[%s262 + $0x8] sm:$0xff]
      %v801 = vld [vmem:[%s262 + $0x10] sm:$0xff]
      %v802 = vld [vmem:[%s262 + $0x18] sm:$0xff]
      %v803 = vld [vmem:[%s262 + $0x20] sm:$0xff]
      %v804 = vld [vmem:[%s262 + $0x28] sm:$0xff]
      %v805 = vld [vmem:[%s262 + $0x30] sm:$0xff]
      %v806 = vld [vmem:[%s262 + $0x38] sm:$0xff]
      %808 = vset.pattern.permute.xlu0 0
      %809 = vperm.xlu0 %808, %v799
      %v810 = vpop.permute.xlu0 %809
      %813 = vset.pattern.permute.xlu0 0
      %814 = vperm.xlu0 %813, %v800
      %v815 = vpop.permute.xlu0 %814
      %818 = vset.pattern.permute.xlu0 0
      %819 = vperm.xlu0 %818, %v801
      %v820 = vpop.permute.xlu0 %819
      %823 = vset.pattern.permute.xlu0 0
      %824 = vperm.xlu0 %823, %v802
      %v825 = vpop.permute.xlu0 %824
      %828 = vset.pattern.permute.xlu0 0
      %829 = vperm.xlu0 %828, %v803
      %v830 = vpop.permute.xlu0 %829
      %833 = vset.pattern.permute.xlu0 0
      %834 = vperm.xlu0 %833, %v804
      %v835 = vpop.permute.xlu0 %834
      %838 = vset.pattern.permute.xlu0 0
      %839 = vperm.xlu0 %838, %v805
      %v840 = vpop.permute.xlu0 %839
      %843 = vset.pattern.permute.xlu0 0
      %844 = vperm.xlu0 %843, %v806
      %v845 = vpop.permute.xlu0 %844
      %v847 = vmul.f32 %v810, %v769
      %v848 = vmul.f32 %v815, %v772
      %v849 = vmul.f32 %v820, %v777
      %v850 = vmul.f32 %v825, %v780
      %v851 = vmul.f32 %v830, %v785
      %v852 = vmul.f32 %v835, %v788
      %v853 = vmul.f32 %v840, %v793
      %v854 = vmul.f32 %v845, %v796
      %v855 = vpack.c.bf16 %v848, %v847
      %v856 = vpack.c.bf16 %v850, %v849
      %v857 = vpack.c.bf16 %v852, %v851
      %v858 = vpack.c.bf16 %v854, %v853
      %v863 = vunpack.c.l.b16 %v855
      %v864 = vunpack.c.h.b16 %v855
      %v865 = vunpack.c.l.b16 %v856
      %v866 = vunpack.c.h.b16 %v856
      %v867 = vunpack.c.l.b16 %v857
      %v868 = vunpack.c.h.b16 %v857
      %v869 = vunpack.c.l.b16 %v858
      %v870 = vunpack.c.h.b16 %v858
      %v871 = vpack.c.b16 %v863, %v863
      %v872 = vpack.c.b16 %v864, %v864
      %v873 = vpack.c.b16 %v865, %v865
      %v874 = vpack.c.b16 %v866, %v866
      %v875 = vpack.c.b16 %v867, %v867
      %v876 = vpack.c.b16 %v868, %v868
      %v877 = vpack.c.b16 %v869, %v869
      %v878 = vpack.c.b16 %v870, %v870
      %887 = vst [vmem:[%s282] sm:$0xf] %v871
      %888 = vst [vmem:[%s282 + $0x4] sm:$0xf] %v872
      %889 = vst [vmem:[%s282 + $0x8] sm:$0xf] %v873
      %890 = vst [vmem:[%s282 + $0xc] sm:$0xf] %v874
      %891 = vst [vmem:[%s282 + $0x10] sm:$0xf] %v875
      %892 = vst [vmem:[%s282 + $0x14] sm:$0xf] %v876
      %893 = vst [vmem:[%s282 + $0x18] sm:$0xf] %v877
      %894 = vst [vmem:[%s282 + $0x1c] sm:$0xf] %v878
      %s895 = smul.u32 8, %s22
      %p896 = scmp.lt.s32.totalorder %s895, 95
      %s897 = scalar_select %p896, %s895, 95
      %s898 = smul.addr %s897, 4
      %s899 = scalar_lea.vmem %s5, %s898
      // Predicated region
      $region37: #{sparse_moe_forward.1} parent=35 // pred_check
        %p900 = pneg %p148
      $region38: #{sparse_moe_forward.1} parent=35 // pred_check_branch
        %902 = sbr.rel (%p900) target = $region40
      $region39: #{sparse_moe_forward.1} parent=35 // pred_region
        %s903 = smul.u32 8, %s22
      $region40: #{sparse_moe_forward.1} parent=35 // pred_fallthru
        _
    $region36: #{sparse_moe_forward.1} parent=5 // pred_fallthru
      _
    %p904 = scmp.le.s32.totalorder 2, %s17
    // Predicated region
    $region41: #{sparse_moe_forward.1} parent=5 // pred_check
      %p905 = pneg %p904
    $region42: #{sparse_moe_forward.1} parent=5 // pred_check_branch
      %907 = sbr.rel (%p905) target = $region44
    $region43: #{sparse_moe_forward.1} parent=5 // pred_region
      %s908 = ssub.s32 %s17, 2
      // Predicated region
      $region45: #{sparse_moe_forward.1} parent=43 // pred_check
        %p909 = pneg %p154
      $region46: #{sparse_moe_forward.1} parent=43 // pred_check_branch
        %911 = sbr.rel (%p909) target = $region48
      $region47: #{sparse_moe_forward.1} parent=43 // pred_region
        %s912 = smul.u32 8, %s23
        %p913 = scmp.lt.s32.totalorder %s912, 95
        %s914 = scalar_select %p913, %s912, 95
        %s915 = smul.addr %s914, 4
        %s916 = scalar_lea.vmem %s5, %s915
      $region48: #{sparse_moe_forward.1} parent=43 // pred_fallthru
        _
    $region44: #{sparse_moe_forward.1} parent=5 // pred_fallthru
      _
  $region6: #{sparse_moe_forward.1} parent=0 // loop_footer
    %s21 = sadd.s32 1, %s17
  $region7: #{sparse_moe_forward.1} parent=0 // loop_footer_branch
    %16 = sbr.rel target = $region3
  $region8: #{sparse_moe_forward.1} parent=0 // loop_exit
    _

</llo_original>
